<compile_context>
chip_gen: v6e
topology: v6e:2x2x1
jax: 0.10.0
libtpu: 0.0.40
codegen_flags: <defaults>
</compile_context>

<pallas_src>
import math

import jax
import jax.numpy as jnp
from jax.experimental import pallas as pl
from jax.experimental.pallas import tpu as pltpu

_LANE = 128


def _round_up(a, b):
    return (a + b - 1) // b * b


def _choose_tiles(n):
    """Pick (n_pad, tm, tk).

    tm: output-row tile (<= 512), tk: contraction tile (<= 1024); both divide
    n_pad.  Prefer big tiles (mem-bound kernel: 128 tiles run at ~29% of the
    HBM roofline vs ~85% at 512) but reject choices that inflate the padded
    adjacency traffic (n_pad^2) by more than ~15% over minimal 128-padding.
    """
    n128 = _round_up(n, _LANE)
    tm = _LANE
    for cand in (512, 384, 256, 128):
        if cand > n128:
            continue
        n_pad_c = _round_up(n, cand)
        if n_pad_c == n128 or n_pad_c * n_pad_c <= int(1.15 * n128 * n128):
            tm = cand
            break
    n_pad = _round_up(n, tm)
    tk = tm
    for m in range(2, 1024 // tm + 1):
        if n_pad % (tm * m) == 0:
            tk = tm * m
    return n_pad, tm, tk


def _pad_cast(a, shape, dtype):
    """Zero-pad `a` to `shape` and cast; no-op (no copy) if already matching."""
    if tuple(a.shape) == tuple(shape) and a.dtype == jnp.dtype(dtype):
        return a
    out = jnp.zeros(shape, dtype)
    return out.at[tuple(slice(0, s) for s in a.shape)].set(a.astype(dtype))


def _gcn_fused_kernel(adj_ref, x_ref, w_ref, b_ref, o_ref):
    # out_tile(i) = sum_k adj(i, k) @ (x(k) @ W) + bias
    #   * W resident in VMEM (constant block index)
    #   * x streamed per contraction tile, adj streamed per (i, k) tile
    #   * o_ref (f32) is resident across k and doubles as the accumulator.
    k = pl.program_id(1)
    s = jnp.dot(x_ref[...], w_ref[...],
                preferred_element_type=jnp.float32).astype(adj_ref.dtype)
    partial = jnp.dot(adj_ref[...], s, preferred_element_type=jnp.float32)

    @pl.when(k == 0)
    def _():
        o_ref[...] = partial + b_ref[...]

    @pl.when(k > 0)
    def _():
        o_ref[...] += partial


def gcn_forward(x, adj, weight, bias=None, *, compute_dtype=jnp.bfloat16):
    """GCN layer: adj @ (x @ weight) + bias, as one fused tiled Pallas kernel."""
    n, f_in = x.shape
    f_out = weight.shape[1]
    out_dtype = x.dtype

    n_pad, tm, tk = _choose_tiles(n)
    f_out_pad = _round_up(f_out, _LANE)

    # Zero-pad / cast operands (skipped when already matching).  Padded rows /
    # columns contribute exactly zero to the result.
    adj_p = _pad_cast(adj, (n_pad, n_pad), compute_dtype)
    x_p = _pad_cast(x, (n_pad, f_in), compute_dtype)
    w_p = _pad_cast(weight, (f_in, f_out_pad), compute_dtype)
    if bias is None:
        b_p = jnp.zeros((1, f_out_pad), jnp.float32)
    else:
        b_p = _pad_cast(bias.reshape(1, f_out), (1, f_out_pad), jnp.float32)

    # VMEM budget: double-buffered streamed blocks + resident W / bias / out.
    # Keep the scoped limit above v5e's 16 MiB default and below v7x's 64 MiB
    # physical VMEM (headroom for compiler-internal scratch included).
    isz = jnp.dtype(compute_dtype).itemsize
    footprint = (
        2 * tm * tk * isz               # adj (double-buffered)
        + 2 * tk * f_in * isz           # x   (double-buffered)
        + 2 * f_in * f_out_pad * isz    # W   (resident)
        + 2 * f_out_pad * 4             # bias
        + 2 * tm * f_out_pad * 4        # f32 output / accumulator
    )
    vmem_limit = int(min(max(2 * footprint + (8 << 20), 32 << 20), 56 << 20))

    out_p = pl.pallas_call(
        _gcn_fused_kernel,
        out_shape=jax.ShapeDtypeStruct((n_pad, f_out_pad), jnp.float32),
        grid_spec=pltpu.PrefetchScalarGridSpec(
            num_scalar_prefetch=0,
            grid=(n_pad // tm, n_pad // tk),
            in_specs=[
                pl.BlockSpec((tm, tk), lambda i, k: (i, k)),            # adj
                pl.BlockSpec((tk, f_in), lambda i, k: (k, 0)),          # x
                pl.BlockSpec((f_in, f_out_pad), lambda i, k: (0, 0)),   # W
                pl.BlockSpec((1, f_out_pad), lambda i, k: (0, 0)),      # bias
            ],
            out_specs=pl.BlockSpec((tm, f_out_pad), lambda i, k: (i, 0)),
        ),
        compiler_params=pltpu.CompilerParams(
            dimension_semantics=("parallel", "arbitrary"),
            vmem_limit_bytes=vmem_limit),
    )(adj_p, x_p, w_p, b_p)

    # TODO(synk): int8 (v5e/v6e) / fp8 (v7x) adjacency quantization would halve
    #             the dominant HBM stream; not applied to keep bf16 semantics.
    return out_p[:n, :f_out].astype(out_dtype)


if __name__ == "__main__":
    # Small, module-consistent shapes: N nodes, in_features -> out_features.
    N = 64
    in_features = 32
    out_features = 16

    key = jax.random.PRNGKey(0)
    k_x, k_adj, k_w, k_b = jax.random.split(key, 4)

    # Node features.
    x = jax.random.normal(k_x, (N, in_features), dtype=jnp.float32)

    # Symmetric, row-normalized dense adjacency (typical GCN preprocessing).
    a = (jax.random.uniform(k_adj, (N, N)) > 0.8).astype(jnp.float32)
    a = jnp.maximum(a, a.T) + jnp.eye(N, dtype=jnp.float32)
    adj = a / jnp.sum(a, axis=1, keepdims=True)

    # Deterministic parameter init matching reset_parameters():
    # uniform(-stdv, stdv) with stdv = 1/sqrt(out_features).
    stdv = 1.0 / math.sqrt(out_features)
    weight = jax.random.uniform(
        k_w, (in_features, out_features), minval=-stdv, maxval=stdv,
        dtype=jnp.float32)
    bias = jax.random.uniform(
        k_b, (out_features,), minval=-stdv, maxval=stdv, dtype=jnp.float32)

    out = gcn_forward(x, adj, weight, bias)
    out = jax.block_until_ready(out)
    assert out.shape == (N, out_features)

    # Matched-precision reference (bf16 MXU inputs, f32 accumulation), plus a
    # loose check against the pure-f32 reference.
    xb = x.astype(jnp.bfloat16)
    ab = adj.astype(jnp.bfloat16)
    wb = weight.astype(jnp.bfloat16)
    sup = jnp.dot(xb, wb, preferred_element_type=jnp.float32).astype(
        jnp.bfloat16)
    ref_matched = jnp.dot(ab, sup, preferred_element_type=jnp.float32) + bias
    ref_f32 = adj @ (x @ weight) + bias

    assert jnp.allclose(out, ref_matched, atol=1e-3, rtol=1e-3), float(
        jnp.max(jnp.abs(out - ref_matched)))
    assert jnp.allclose(out, ref_f32, atol=5e-2, rtol=5e-2), float(
        jnp.max(jnp.abs(out - ref_f32)))

    print("KERNEL_OK")
</pallas_src>

<mosaic_0001>
module attributes {stable_mosaic.version = 11 : i64} {
  func.func @_gcn_fused_kernel(%arg0: i32, %arg1: i32, %arg2: memref<128x128xbf16, #tpu.memory_space<vmem>>, %arg3: memref<128x32xbf16, #tpu.memory_space<vmem>>, %arg4: memref<32x128xbf16, #tpu.memory_space<vmem>>, %arg5: memref<1x128xf32, #tpu.memory_space<vmem>>, %arg6: memref<128x128xf32, #tpu.memory_space<vmem>>) attributes {dimension_semantics = [#tpu.dimension_semantics<parallel>, #tpu.dimension_semantics<arbitrary>], iteration_bounds = array<i64: 1, 1>, scalar_prefetch = 0 : i64, scratch_operands = 0 : i64, tpu.core_type = #tpu.core_type<tc>, window_params = [{transform_indices = @transform_0, window_bounds = array<i64: 128, 128>}, {transform_indices = @transform_1, window_bounds = array<i64: 128, 32>}, {pipeline_mode = #tpu.pipeline_mode<synchronous>, transform_indices = @transform_2, window_bounds = array<i64: 32, 128>}, {pipeline_mode = #tpu.pipeline_mode<synchronous>, transform_indices = @transform_3, window_bounds = array<i64: 1, 128>}, {transform_indices = @transform_4, window_bounds = array<i64: 128, 128>}]} {
    %c0 = arith.constant 0 : index
    %c0_0 = arith.constant 0 : index
    %0 = vector.load %arg3[%c0, %c0_0] : memref<128x32xbf16, #tpu.memory_space<vmem>>, vector<128x32xbf16>
    %c0_1 = arith.constant 0 : index
    %c0_2 = arith.constant 0 : index
    %1 = vector.load %arg4[%c0_1, %c0_2] : memref<32x128xbf16, #tpu.memory_space<vmem>>, vector<32x128xbf16>
    %cst = arith.constant dense<0.000000e+00> : vector<128x128xf32>
    %2 = tpu.matmul %0, %1, %cst {dimension_numbers = #tpu.dot_dimension_numbers<[1], [0], [0], [1], [0, 0, 1, 1], [], []>} : vector<128x32xbf16>, vector<32x128xbf16>, vector<128x128xf32> -> vector<128x128xf32>
    %3 = arith.truncf %2 : vector<128x128xf32> to vector<128x128xbf16>
    %c0_3 = arith.constant 0 : index
    %c0_4 = arith.constant 0 : index
    %4 = vector.load %arg2[%c0_3, %c0_4] : memref<128x128xbf16, #tpu.memory_space<vmem>>, vector<128x128xbf16>
    %cst_5 = arith.constant dense<0.000000e+00> : vector<128x128xf32>
    %5 = tpu.matmul %4, %3, %cst_5 {dimension_numbers = #tpu.dot_dimension_numbers<[1], [0], [0], [1], [0, 0, 1, 1], [], []>} : vector<128x128xbf16>, vector<128x128xbf16>, vector<128x128xf32> -> vector<128x128xf32>
    %c0_i32 = arith.constant 0 : i32
    %6 = arith.cmpi eq, %arg1, %c0_i32 : i32
    %7 = arith.extui %6 : i1 to i32
    %c0_i32_6 = arith.constant 0 : i32
    %8 = arith.cmpi ne, %7, %c0_i32_6 : i32
    scf.if %8 {
      %c0_9 = arith.constant 0 : index
      %c0_10 = arith.constant 0 : index
      %12 = vector.load %arg5[%c0_9, %c0_10] : memref<1x128xf32, #tpu.memory_space<vmem>>, vector<1x128xf32>
      %13 = vector.broadcast %12 : vector<1x128xf32> to vector<128x128xf32>
      %14 = arith.addf %5, %13 : vector<128x128xf32>
      %c0_11 = arith.constant 0 : index
      %c0_12 = arith.constant 0 : index
      %15 = vector.load %arg6[%c0_11, %c0_12] : memref<128x128xf32, #tpu.memory_space<vmem>>, vector<128x128xf32>
      tpu.vector_store %arg6[%c0_11, %c0_12], %14 {strides = array<i32>} : memref<128x128xf32, #tpu.memory_space<vmem>>, vector<128x128xf32>,
    } else {
    }
    %c0_i32_7 = arith.constant 0 : i32
    %9 = arith.cmpi sgt, %arg1, %c0_i32_7 : i32
    %10 = arith.extui %9 : i1 to i32
    %c0_i32_8 = arith.constant 0 : i32
    %11 = arith.cmpi ne, %10, %c0_i32_8 : i32
    scf.if %11 {
      %c0_9 = arith.constant 0 : index
      %c0_10 = arith.constant 0 : index
      %12 = vector.load %arg6[%c0_9, %c0_10] : memref<128x128xf32, #tpu.memory_space<vmem>>, vector<128x128xf32>
      %13 = arith.addf %12, %5 : vector<128x128xf32>
      %c0_11 = arith.constant 0 : index
      %c0_12 = arith.constant 0 : index
      %14 = vector.load %arg6[%c0_11, %c0_12] : memref<128x128xf32, #tpu.memory_space<vmem>>, vector<128x128xf32>
      tpu.vector_store %arg6[%c0_11, %c0_12], %13 {strides = array<i32>} : memref<128x128xf32, #tpu.memory_space<vmem>>, vector<128x128xf32>,
    } else {
    }
    return
  }
  func.func @transform_0(%arg0: i32, %arg1: i32) -> (i32, i32) {
    %c0_i32 = arith.constant 0 : i32
    return %arg0, %arg1 : i32, i32
  }
  func.func @transform_1(%arg0: i32, %arg1: i32) -> (i32, i32) {
    %c0_i32 = arith.constant 0 : i32
    %c0_i32_0 = arith.constant 0 : i32
    return %arg1, %c0_i32 : i32, i32
  }
  func.func @transform_2(%arg0: i32, %arg1: i32) -> (i32, i32) {
    %c0_i32 = arith.constant 0 : i32
    %c0_i32_0 = arith.constant 0 : i32
    %c0_i32_1 = arith.constant 0 : i32
    return %c0_i32, %c0_i32_0 : i32, i32
  }
  func.func @transform_3(%arg0: i32, %arg1: i32) -> (i32, i32) {
    %c0_i32 = arith.constant 0 : i32
    %c0_i32_0 = arith.constant 0 : i32
    %c0_i32_1 = arith.constant 0 : i32
    return %c0_i32, %c0_i32_0 : i32, i32
  }
  func.func @transform_4(%arg0: i32, %arg1: i32) -> (i32, i32) {
    %c0_i32 = arith.constant 0 : i32
    %c0_i32_0 = arith.constant 0 : i32
    return %arg0, %c0_i32 : i32, i32
  }
}

</mosaic_0001>

<llo_original>
// kernel: tpu_custom_call.1
$region0: #{tpu_custom_call.1}
  #allocation0 [shape = 'u32[]', space=smem, size = 0x4, offset = 0x4, fixed_abs, tag = 'smem constant byte address 0x4 - core index']
  #allocation1 [shape = 'u32[144,128]{1,0:T(1,128)}', space=vmem, size = 0x12000, scoped, tag = 'internal scratch']
  %s0 = inlined_call_operand.vmem [shape: bf16[128,128], index: 0, kind: input, shape index: {}]
  %s1 = inlined_call_operand.vmem [shape: bf16[128,32], index: 1, kind: input, shape index: {}]
  %s2 = inlined_call_operand.vmem [shape: bf16[32,128], index: 2, kind: input, shape index: {}]
  %s3 = inlined_call_operand.vmem [shape: f32[1,128], index: 3, kind: input, shape index: {}]
  %s4 = inlined_call_operand.hbm [shape: f32[128,128], index: 4, kind: output, shape index: {}]
  %s5 = sld [smem:[#allocation0]]
  $region34: #{tpu_custom_call.1} parent=0
    _
  %s7 = ssub.s32 1, %s5
  %s8 = scalar_select 0, %s7, %s5
  $region1: #{tpu_custom_call.1} parent=0
    #allocation2 [shape = 'u8[65536]{0}', space=vmem, size = 0x10000, scoped, tag = 'output window, operand 0, single buffered']
    #allocation3 [shape = 's32[1]{0}', space=sflag, size = 0x4, scoped, tag = 'scoped memory for tpu_custom_call.1']
    %9 = vsyncpa [#allocation3], 0
    // Predicated region
    $region2: #{tpu_custom_call.1} parent=1 // pred_check
      _
    $region3: #{tpu_custom_call.1} parent=1 // pred_check_branch
      %11 = sbr.rel (0) target = $region5
    $region4: #{tpu_custom_call.1} parent=1 // pred_region
      _
    $region5: #{tpu_custom_call.1} parent=1 // pred_fallthru
      _
    // Predicated region
    $region6: #{tpu_custom_call.1} parent=1 // pred_check
      _
    $region7: #{tpu_custom_call.1} parent=1 // pred_check_branch
      %13 = sbr.rel (0) target = $region9
    $region8: #{tpu_custom_call.1} parent=1 // pred_region
      _
    $region9: #{tpu_custom_call.1} parent=1 // pred_fallthru
      _
    // Predicated region
    $region10: #{tpu_custom_call.1} parent=1 // pred_check
      _
    $region11: #{tpu_custom_call.1} parent=1 // pred_check_branch
      %15 = sbr.rel (0) target = $region13
    $region12: #{tpu_custom_call.1} parent=1 // pred_region
      _
    $region13: #{tpu_custom_call.1} parent=1 // pred_fallthru
      _
    // Predicated region
    $region14: #{tpu_custom_call.1} parent=1 // pred_check
      _
    $region15: #{tpu_custom_call.1} parent=1 // pred_check_branch
      %17 = sbr.rel (0) target = $region17
    $region16: #{tpu_custom_call.1} parent=1 // pred_region
      _
    $region17: #{tpu_custom_call.1} parent=1 // pred_fallthru
      _
    %v19 = vld [vmem:[%s1] sm:$0xf]
    %v20 = vld [vmem:[%s1 + $0x4] sm:$0xf]
    %v21 = vld [vmem:[%s1 + $0x8] sm:$0xf]
    %v22 = vld [vmem:[%s1 + $0xc] sm:$0xf]
    %v23 = vld [vmem:[%s1 + $0x10] sm:$0xf]
    %v24 = vld [vmem:[%s1 + $0x14] sm:$0xf]
    %v25 = vld [vmem:[%s1 + $0x18] sm:$0xf]
    %v26 = vld [vmem:[%s1 + $0x1c] sm:$0xf]
    %v27 = vld [vmem:[%s1 + $0x20] sm:$0xf]
    %v28 = vld [vmem:[%s1 + $0x24] sm:$0xf]
    %v29 = vld [vmem:[%s1 + $0x28] sm:$0xf]
    %v30 = vld [vmem:[%s1 + $0x2c] sm:$0xf]
    %v31 = vld [vmem:[%s1 + $0x30] sm:$0xf]
    %v32 = vld [vmem:[%s1 + $0x34] sm:$0xf]
    %v33 = vld [vmem:[%s1 + $0x38] sm:$0xf]
    %v34 = vld [vmem:[%s1 + $0x3c] sm:$0xf]
    %v35 = vld [vmem:[%s2] sm:$0xf]
    %v36 = vld [vmem:[%s2 + $0x4] sm:$0xf]
    %v37 = vld [vmem:[%s2 + $0x8] sm:$0xf]
    %v38 = vld [vmem:[%s2 + $0xc] sm:$0xf]
    %v55 = vunpack.c.l.b16 %v19
    %v56 = vunpack.c.l.b16 %v20
    %v57 = vunpack.c.l.b16 %v21
    %v58 = vunpack.c.l.b16 %v22
    %v59 = vunpack.c.l.b16 %v23
    %v60 = vunpack.c.l.b16 %v24
    %v61 = vunpack.c.l.b16 %v25
    %v62 = vunpack.c.l.b16 %v26
    %v63 = vunpack.c.l.b16 %v27
    %v64 = vunpack.c.l.b16 %v28
    %v65 = vunpack.c.l.b16 %v29
    %v66 = vunpack.c.l.b16 %v30
    %v67 = vunpack.c.l.b16 %v31
    %v68 = vunpack.c.l.b16 %v32
    %v69 = vunpack.c.l.b16 %v33
    %v70 = vunpack.c.l.b16 %v34
    %v71 = vpack.c.b16 %v56, %v55
    %v72 = vpack.c.b16 %v58, %v57
    %v73 = vpack.c.b16 %v60, %v59
    %v74 = vpack.c.b16 %v62, %v61
    %v75 = vpack.c.b16 %v64, %v63
    %v76 = vpack.c.b16 %v66, %v65
    %v77 = vpack.c.b16 %v68, %v67
    %v78 = vpack.c.b16 %v70, %v69
    %v83 = vunpack.c.l.b16 %v35
    %v84 = vunpack.c.l.b16 %v36
    %v85 = vunpack.c.l.b16 %v37
    %v86 = vunpack.c.l.b16 %v38
    %v87 = vpack.c.b16 %v84, %v83
    %v88 = vpack.c.b16 %v86, %v85
    %vm91 = vcmask 261120
    %v93 = vsel %vm91, %v71, 0
    %v96 = vsel %vm91, %v72, 0
    %v99 = vsel %vm91, %v73, 0
    %v102 = vsel %vm91, %v74, 0
    %v105 = vsel %vm91, %v75, 0
    %v108 = vsel %vm91, %v76, 0
    %v111 = vsel %vm91, %v77, 0
    %v114 = vsel %vm91, %v78, 0
    %116 = vmatprep.subr.bf16.mxu0 0
    %117 = vmatpush1.bf16.msra.mxu0 0
    %118 = vmatprep.subr.bf16.mxu0 0
    %119 = vmatpush1.bf16.msra.mxu0 0
    %120 = vmatprep.subr.bf16.mxu0 0
    %121 = vmatpush1.bf16.msra.mxu0 0
    %122 = vmatprep.subr.bf16.mxu0 0
    %123 = vmatpush1.bf16.msra.mxu0 0
    %124 = vmatprep.subr.bf16.mxu0 0
    %125 = vmatpush1.bf16.msra.mxu0 0
    %126 = vmatprep.subr.bf16.mxu0 0
    %127 = vmatpush1.bf16.msra.mxu0 0
    %128 = vmatprep.subr.bf16.mxu0 0
    %129 = vmatpush1.bf16.msra.mxu0 %v88
    %130 = vmatprep.subr.bf16.mxu0 0
    %131 = vmatpush1.bf16.msra.mxu0 %v87
    %132 = vmatprep.subr.bf16.mxu0 0
    %133 = vmatpush2.bf16.msra.mxu0 0
    %134 = vmatprep.subr.bf16.mxu0 0
    %135 = vmatpush2.bf16.msra.mxu0 0
    %136 = vmatprep.subr.bf16.mxu0 0
    %137 = vmatpush2.bf16.msra.mxu0 0
    %138 = vmatprep.subr.bf16.mxu0 0
    %139 = vmatpush2.bf16.msra.mxu0 0
    %140 = vmatprep.subr.bf16.mxu0 0
    %141 = vmatpush2.bf16.msra.mxu0 0
    %142 = vmatprep.subr.bf16.mxu0 0
    %143 = vmatpush2.bf16.msra.mxu0 0
    %144 = vmatprep.subr.bf16.mxu0 0
    %145 = vmatpush2.bf16.msra.mxu0 0
    %146 = vmatprep.subr.bf16.mxu0 0
    %147 = vmatpush2.bf16.msra.mxu0 0
    %148 = vmatprep.mubr.bf16.mxu0 0
    %149 = vmatmul.mubr.bf16.gmra.mxu0 %v93
    %v150 = vpop.f32.mrf.mxu0
    %v151 = vadd.f32 0.0, %v150
    %v152 = vpop.f32.mrf.mxu0
    %v153 = vpop.f32.mrf.mxu0
    %v154 = vadd.f32 0.0, %v153
    %v155 = vpop.f32.mrf.mxu0
    %156 = vmatprep.mubr.bf16.mxu0 0
    %157 = vmatmul.mubr.bf16.gmra.mxu0 %v96
    %v158 = vpop.f32.mrf.mxu0
    %v159 = vadd.f32 0.0, %v158
    %v160 = vpop.f32.mrf.mxu0
    %v161 = vpop.f32.mrf.mxu0
    %v162 = vadd.f32 0.0, %v161
    %v163 = vpop.f32.mrf.mxu0
    %164 = vmatprep.mubr.bf16.mxu0 0
    %165 = vmatmul.mubr.bf16.gmra.mxu0 %v99
    %v166 = vpop.f32.mrf.mxu0
    %v167 = vadd.f32 0.0, %v166
    %v168 = vpop.f32.mrf.mxu0
    %v169 = vpop.f32.mrf.mxu0
    %v170 = vadd.f32 0.0, %v169
    %v171 = vpop.f32.mrf.mxu0
    %172 = vmatprep.mubr.bf16.mxu0 0
    %173 = vmatmul.mubr.bf16.gmra.mxu0 %v102
    %v174 = vpop.f32.mrf.mxu0
    %v175 = vadd.f32 0.0, %v174
    %v176 = vpop.f32.mrf.mxu0
    %v177 = vpop.f32.mrf.mxu0
    %v178 = vadd.f32 0.0, %v177
    %v179 = vpop.f32.mrf.mxu0
    %180 = vmatprep.mubr.bf16.mxu0 0
    %181 = vmatmul.mubr.bf16.gmra.mxu0 %v105
    %v182 = vpop.f32.mrf.mxu0
    %v183 = vadd.f32 0.0, %v182
    %v184 = vpop.f32.mrf.mxu0
    %v185 = vpop.f32.mrf.mxu0
    %v186 = vadd.f32 0.0, %v185
    %v187 = vpop.f32.mrf.mxu0
    %188 = vmatprep.mubr.bf16.mxu0 0
    %189 = vmatmul.mubr.bf16.gmra.mxu0 %v108
    %v190 = vpop.f32.mrf.mxu0
    %v191 = vadd.f32 0.0, %v190
    %v192 = vpop.f32.mrf.mxu0
    %v193 = vpop.f32.mrf.mxu0
    %v194 = vadd.f32 0.0, %v193
    %v195 = vpop.f32.mrf.mxu0
    %196 = vmatprep.mubr.bf16.mxu0 0
    %197 = vmatmul.mubr.bf16.gmra.mxu0 %v111
    %v198 = vpop.f32.mrf.mxu0
    %v199 = vadd.f32 0.0, %v198
    %v200 = vpop.f32.mrf.mxu0
    %v201 = vpop.f32.mrf.mxu0
    %v202 = vadd.f32 0.0, %v201
    %v203 = vpop.f32.mrf.mxu0
    %204 = vmatprep.mubr.bf16.mxu0 0
    %205 = vmatmul.mubr.bf16.gmra.mxu0 %v114
    %v206 = vpop.f32.mrf.mxu0
    %v207 = vadd.f32 0.0, %v206
    %v208 = vpop.f32.mrf.mxu0
    %v209 = vpop.f32.mrf.mxu0
    %v210 = vadd.f32 0.0, %v209
    %v211 = vpop.f32.mrf.mxu0
    %212 = vdwg.mxu0
    %v213 = vpack.c.bf16 %v154, %v151
    %v214 = vpack.c.bf16 %v162, %v159
    %v215 = vpack.c.bf16 %v170, %v167
    %v216 = vpack.c.bf16 %v178, %v175
    %v217 = vpack.c.bf16 %v186, %v183
    %v218 = vpack.c.bf16 %v194, %v191
    %v219 = vpack.c.bf16 %v202, %v199
    %v220 = vpack.c.bf16 %v210, %v207
    %v221 = vld [vmem:[%s0] sm:$0xf]
    %v222 = vld [vmem:[%s0 + $0x4] sm:$0xf]
    %v223 = vld [vmem:[%s0 + $0x8] sm:$0xf]
    %v224 = vld [vmem:[%s0 + $0xc] sm:$0xf]
    %v225 = vld [vmem:[%s0 + $0x10] sm:$0xf]
    %v226 = vld [vmem:[%s0 + $0x14] sm:$0xf]
    %v227 = vld [vmem:[%s0 + $0x18] sm:$0xf]
    %v228 = vld [vmem:[%s0 + $0x1c] sm:$0xf]
    %v229 = vld [vmem:[%s0 + $0x20] sm:$0xf]
    %v230 = vld [vmem:[%s0 + $0x24] sm:$0xf]
    %v231 = vld [vmem:[%s0 + $0x28] sm:$0xf]
    %v232 = vld [vmem:[%s0 + $0x2c] sm:$0xf]
    %v233 = vld [vmem:[%s0 + $0x30] sm:$0xf]
    %v234 = vld [vmem:[%s0 + $0x34] sm:$0xf]
    %v235 = vld [vmem:[%s0 + $0x38] sm:$0xf]
    %v236 = vld [vmem:[%s0 + $0x3c] sm:$0xf]
    %v253 = vunpack.c.l.b16 %v221
    %v254 = vunpack.c.l.b16 %v222
    %v255 = vunpack.c.l.b16 %v223
    %v256 = vunpack.c.l.b16 %v224
    %v257 = vunpack.c.l.b16 %v225
    %v258 = vunpack.c.l.b16 %v226
    %v259 = vunpack.c.l.b16 %v227
    %v260 = vunpack.c.l.b16 %v228
    %v261 = vunpack.c.l.b16 %v229
    %v262 = vunpack.c.l.b16 %v230
    %v263 = vunpack.c.l.b16 %v231
    %v264 = vunpack.c.l.b16 %v232
    %v265 = vunpack.c.l.b16 %v233
    %v266 = vunpack.c.l.b16 %v234
    %v267 = vunpack.c.l.b16 %v235
    %v268 = vunpack.c.l.b16 %v236
    %v269 = vpack.c.b16 %v254, %v253
    %v270 = vpack.c.b16 %v256, %v255
    %v271 = vpack.c.b16 %v258, %v257
    %v272 = vpack.c.b16 %v260, %v259
    %v273 = vpack.c.b16 %v262, %v261
    %v274 = vpack.c.b16 %v264, %v263
    %v275 = vpack.c.b16 %v266, %v265
    %v276 = vpack.c.b16 %v268, %v267
    %285 = vmatprep.subr.bf16.mxu0 0
    %286 = vmatpush1.bf16.msra.mxu0 %v220
    %287 = vmatprep.subr.bf16.mxu0 0
    %288 = vmatpush1.bf16.msra.mxu0 %v219
    %289 = vmatprep.subr.bf16.mxu0 0
    %290 = vmatpush1.bf16.msra.mxu0 %v218
    %291 = vmatprep.subr.bf16.mxu0 0
    %292 = vmatpush1.bf16.msra.mxu0 %v217
    %293 = vmatprep.subr.bf16.mxu0 0
    %294 = vmatpush1.bf16.msra.mxu0 %v216
    %295 = vmatprep.subr.bf16.mxu0 0
    %296 = vmatpush1.bf16.msra.mxu0 %v215
    %297 = vmatprep.subr.bf16.mxu0 0
    %298 = vmatpush1.bf16.msra.mxu0 %v214
    %299 = vmatprep.subr.bf16.mxu0 0
    %300 = vmatpush1.bf16.msra.mxu0 %v213
    %301 = vmatprep.subr.bf16.mxu0 0
    %302 = vmatpush2.bf16.msra.mxu0 0
    %303 = vmatprep.subr.bf16.mxu0 0
    %304 = vmatpush2.bf16.msra.mxu0 0
    %305 = vmatprep.subr.bf16.mxu0 0
    %306 = vmatpush2.bf16.msra.mxu0 0
    %307 = vmatprep.subr.bf16.mxu0 0
    %308 = vmatpush2.bf16.msra.mxu0 0
    %309 = vmatprep.subr.bf16.mxu0 0
    %310 = vmatpush2.bf16.msra.mxu0 0
    %311 = vmatprep.subr.bf16.mxu0 0
    %312 = vmatpush2.bf16.msra.mxu0 0
    %313 = vmatprep.subr.bf16.mxu0 0
    %314 = vmatpush2.bf16.msra.mxu0 0
    %315 = vmatprep.subr.bf16.mxu0 0
    %316 = vmatpush2.bf16.msra.mxu0 0
    %317 = vmatprep.mubr.bf16.mxu0 0
    %318 = vmatmul.mubr.bf16.gmra.mxu0 %v269
    %v319 = vpop.f32.mrf.mxu0
    %v320 = vadd.f32 0.0, %v319
    %v321 = vpop.f32.mrf.mxu0
    %v322 = vpop.f32.mrf.mxu0
    %v323 = vadd.f32 0.0, %v322
    %v324 = vpop.f32.mrf.mxu0
    %325 = vmatprep.mubr.bf16.mxu0 0
    %326 = vmatmul.mubr.bf16.gmra.mxu0 %v270
    %v327 = vpop.f32.mrf.mxu0
    %v328 = vadd.f32 0.0, %v327
    %v329 = vpop.f32.mrf.mxu0
    %v330 = vpop.f32.mrf.mxu0
    %v331 = vadd.f32 0.0, %v330
    %v332 = vpop.f32.mrf.mxu0
    %333 = vmatprep.mubr.bf16.mxu0 0
    %334 = vmatmul.mubr.bf16.gmra.mxu0 %v271
    %v335 = vpop.f32.mrf.mxu0
    %v336 = vadd.f32 0.0, %v335
    %v337 = vpop.f32.mrf.mxu0
    %v338 = vpop.f32.mrf.mxu0
    %v339 = vadd.f32 0.0, %v338
    %v340 = vpop.f32.mrf.mxu0
    %341 = vmatprep.mubr.bf16.mxu0 0
    %342 = vmatmul.mubr.bf16.gmra.mxu0 %v272
    %v343 = vpop.f32.mrf.mxu0
    %v344 = vadd.f32 0.0, %v343
    %v345 = vpop.f32.mrf.mxu0
    %v346 = vpop.f32.mrf.mxu0
    %v347 = vadd.f32 0.0, %v346
    %v348 = vpop.f32.mrf.mxu0
    %349 = vmatprep.mubr.bf16.mxu0 0
    %350 = vmatmul.mubr.bf16.gmra.mxu0 %v273
    %v351 = vpop.f32.mrf.mxu0
    %v352 = vadd.f32 0.0, %v351
    %v353 = vpop.f32.mrf.mxu0
    %v354 = vpop.f32.mrf.mxu0
    %v355 = vadd.f32 0.0, %v354
    %v356 = vpop.f32.mrf.mxu0
    %357 = vmatprep.mubr.bf16.mxu0 0
    %358 = vmatmul.mubr.bf16.gmra.mxu0 %v274
    %v359 = vpop.f32.mrf.mxu0
    %v360 = vadd.f32 0.0, %v359
    %v361 = vpop.f32.mrf.mxu0
    %v362 = vpop.f32.mrf.mxu0
    %v363 = vadd.f32 0.0, %v362
    %v364 = vpop.f32.mrf.mxu0
    %365 = vmatprep.mubr.bf16.mxu0 0
    %366 = vmatmul.mubr.bf16.gmra.mxu0 %v275
    %v367 = vpop.f32.mrf.mxu0
    %v368 = vadd.f32 0.0, %v367
    %v369 = vpop.f32.mrf.mxu0
    %v370 = vpop.f32.mrf.mxu0
    %v371 = vadd.f32 0.0, %v370
    %v372 = vpop.f32.mrf.mxu0
    %373 = vmatprep.mubr.bf16.mxu0 0
    %374 = vmatmul.mubr.bf16.gmra.mxu0 %v276
    %v375 = vpop.f32.mrf.mxu0
    %v376 = vadd.f32 0.0, %v375
    %v377 = vpop.f32.mrf.mxu0
    %v378 = vpop.f32.mrf.mxu0
    %v379 = vadd.f32 0.0, %v378
    %v380 = vpop.f32.mrf.mxu0
    %381 = vdwg.mxu0
    %p382 = scmp.eq.s32.totalorder 0, 0
    // Predicated region
    $region18: #{tpu_custom_call.1} parent=1 // pred_check
      %p383 = pneg %p382
    $region19: #{tpu_custom_call.1} parent=1 // pred_check_branch
      %385 = sbr.rel (%p383) target = $region21
    $region20: #{tpu_custom_call.1} parent=1 // pred_region
      %v386 = vld [vmem:[%s3] sm:$0x1]
      %v388 = vlaneseq
      %v389 = vshrl.u32 %v388, 7
      %v390 = vsub.s32 0, %v389
      %v391 = vrot.slane %v386, %v390
      %v393 = vadd.f32 %v320, %v391
      %v394 = vadd.f32 %v323, %v391
      %v395 = vadd.f32 %v328, %v391
      %v396 = vadd.f32 %v331, %v391
      %v397 = vadd.f32 %v336, %v391
      %v398 = vadd.f32 %v339, %v391
      %v399 = vadd.f32 %v344, %v391
      %v400 = vadd.f32 %v347, %v391
      %v401 = vadd.f32 %v352, %v391
      %v402 = vadd.f32 %v355, %v391
      %v403 = vadd.f32 %v360, %v391
      %v404 = vadd.f32 %v363, %v391
      %v405 = vadd.f32 %v368, %v391
      %v406 = vadd.f32 %v371, %v391
      %v407 = vadd.f32 %v376, %v391
      %v408 = vadd.f32 %v379, %v391
      %409 = vst [vmem:[#allocation2] sm:$0xff] %v393
      %410 = vst [vmem:[#allocation2 + $0x8] sm:$0xff] %v394
      %411 = vst [vmem:[#allocation2 + $0x10] sm:$0xff] %v395
      %412 = vst [vmem:[#allocation2 + $0x18] sm:$0xff] %v396
      %413 = vst [vmem:[#allocation2 + $0x20] sm:$0xff] %v397
      %414 = vst [vmem:[#allocation2 + $0x28] sm:$0xff] %v398
      %415 = vst [vmem:[#allocation2 + $0x30] sm:$0xff] %v399
      %416 = vst [vmem:[#allocation2 + $0x38] sm:$0xff] %v400
      %417 = vst [vmem:[#allocation2 + $0x40] sm:$0xff] %v401
      %418 = vst [vmem:[#allocation2 + $0x48] sm:$0xff] %v402
      %419 = vst [vmem:[#allocation2 + $0x50] sm:$0xff] %v403
      %420 = vst [vmem:[#allocation2 + $0x58] sm:$0xff] %v404
      %421 = vst [vmem:[#allocation2 + $0x60] sm:$0xff] %v405
      %422 = vst [vmem:[#allocation2 + $0x68] sm:$0xff] %v406
      %423 = vst [vmem:[#allocation2 + $0x70] sm:$0xff] %v407
      %424 = vst [vmem:[#allocation2 + $0x78] sm:$0xff] %v408
    $region21: #{tpu_custom_call.1} parent=1 // pred_fallthru
      _
    %p425 = scmp.gt.s32.totalorder 0, 0
    // Predicated region
    $region22: #{tpu_custom_call.1} parent=1 // pred_check
      %p426 = pneg %p425
    $region23: #{tpu_custom_call.1} parent=1 // pred_check_branch
      %428 = sbr.rel (%p426) target = $region25
    $region24: #{tpu_custom_call.1} parent=1 // pred_region
      %v429 = vld [vmem:[#allocation2] sm:$0xff]
      %v430 = vld [vmem:[#allocation2 + $0x8] sm:$0xff]
      %v431 = vld [vmem:[#allocation2 + $0x10] sm:$0xff]
      %v432 = vld [vmem:[#allocation2 + $0x18] sm:$0xff]
      %v433 = vld [vmem:[#allocation2 + $0x20] sm:$0xff]
      %v434 = vld [vmem:[#allocation2 + $0x28] sm:$0xff]
      %v435 = vld [vmem:[#allocation2 + $0x30] sm:$0xff]
      %v436 = vld [vmem:[#allocation2 + $0x38] sm:$0xff]
      %v437 = vld [vmem:[#allocation2 + $0x40] sm:$0xff]
      %v438 = vld [vmem:[#allocation2 + $0x48] sm:$0xff]
      %v439 = vld [vmem:[#allocation2 + $0x50] sm:$0xff]
      %v440 = vld [vmem:[#allocation2 + $0x58] sm:$0xff]
      %v441 = vld [vmem:[#allocation2 + $0x60] sm:$0xff]
      %v442 = vld [vmem:[#allocation2 + $0x68] sm:$0xff]
      %v443 = vld [vmem:[#allocation2 + $0x70] sm:$0xff]
      %v444 = vld [vmem:[#allocation2 + $0x78] sm:$0xff]
      %v445 = vadd.f32 %v429, %v320
      %v446 = vadd.f32 %v430, %v323
      %v447 = vadd.f32 %v431, %v328
      %v448 = vadd.f32 %v432, %v331
      %v449 = vadd.f32 %v433, %v336
      %v450 = vadd.f32 %v434, %v339
      %v451 = vadd.f32 %v435, %v344
      %v452 = vadd.f32 %v436, %v347
      %v453 = vadd.f32 %v437, %v352
      %v454 = vadd.f32 %v438, %v355
      %v455 = vadd.f32 %v439, %v360
      %v456 = vadd.f32 %v440, %v363
      %v457 = vadd.f32 %v441, %v368
      %v458 = vadd.f32 %v442, %v371
      %v459 = vadd.f32 %v443, %v376
      %v460 = vadd.f32 %v444, %v379
      %461 = vst [vmem:[#allocation2] sm:$0xff] %v445
      %462 = vst [vmem:[#allocation2 + $0x8] sm:$0xff] %v446
      %463 = vst [vmem:[#allocation2 + $0x10] sm:$0xff] %v447
      %464 = vst [vmem:[#allocation2 + $0x18] sm:$0xff] %v448
      %465 = vst [vmem:[#allocation2 + $0x20] sm:$0xff] %v449
      %466 = vst [vmem:[#allocation2 + $0x28] sm:$0xff] %v450
      %467 = vst [vmem:[#allocation2 + $0x30] sm:$0xff] %v451
      %468 = vst [vmem:[#allocation2 + $0x38] sm:$0xff] %v452
      %469 = vst [vmem:[#allocation2 + $0x40] sm:$0xff] %v453
      %470 = vst [vmem:[#allocation2 + $0x48] sm:$0xff] %v454
      %471 = vst [vmem:[#allocation2 + $0x50] sm:$0xff] %v455
      %472 = vst [vmem:[#allocation2 + $0x58] sm:$0xff] %v456
      %473 = vst [vmem:[#allocation2 + $0x60] sm:$0xff] %v457
      %474 = vst [vmem:[#allocation2 + $0x68] sm:$0xff] %v458
      %475 = vst [vmem:[#allocation2 + $0x70] sm:$0xff] %v459
      %476 = vst [vmem:[#allocation2 + $0x78] sm:$0xff] %v460
    $region25: #{tpu_custom_call.1} parent=1 // pred_fallthru
      _
    // Predicated region
    $region26: #{tpu_custom_call.1} parent=1 // pred_check
      _
    $region27: #{tpu_custom_call.1} parent=1 // pred_check_branch
      %478 = sbr.rel (0) target = $region29
    $region28: #{tpu_custom_call.1} parent=1 // pred_region
      %s480 = ssub.s32 2048, 2048
      %481 = vsyncadd [#allocation3], %s480
      %s482 = sshll.u32 [#allocation2], 4
      %s483 = int_to_ptr.vmem [resolvable:$true] %s482
      %488 = dma.vmem_to_hbm [thread:$0]  %s483, 2048, %s4, [#allocation3], 128, 128, 8
    $region29: #{tpu_custom_call.1} parent=1 // pred_fallthru
      _
    // Predicated region
    $region30: #{tpu_custom_call.1} parent=1 // pred_check
      _
    $region31: #{tpu_custom_call.1} parent=1 // pred_check_branch
      %490 = sbr.rel (0) target = $region33
    $region32: #{tpu_custom_call.1} parent=1 // pred_region
      %491 = dma.done [#allocation3], 2048
    $region33: #{tpu_custom_call.1} parent=1 // pred_fallthru
      _
    %492 = vsyncpa [#allocation3], 1

</llo_original>
